<compile_context>
chip_gen: v7x
topology: tpu7x:2x2x1
jax: 0.10.0
libtpu: 0.0.40
codegen_flags: <defaults>
</compile_context>

<pallas_src>
import functools

import jax
import jax.numpy as jnp
from jax.experimental import pallas as pl
from jax.experimental.pallas import tpu as pltpu


def _pair(x):
    if isinstance(x, (tuple, list)):
        return tuple(x)
    return (x, x)


def _round_up(x, m):
    return (x + m - 1) // m * m


def _matmul_bias_kernel(lhs_ref, rhs_ref, b_ref, o_ref):
    """One grid step: (TM, K) @ (K, TO) on the MXU, f32 acc, fused bias.

    lhs_ref: (TM, K)   im2col rows (native / compute dtype)
    rhs_ref: (K, TO)   flattened weights
    b_ref:   (1, TO)   bias (zero-padded)
    o_ref:   (TM, TO)  output tile (lane/sublane dense)
    """
    acc = jax.lax.dot_general(
        lhs_ref[...], rhs_ref[...],
        dimension_numbers=(((1,), (0,)), ((), ())),
        preferred_element_type=jnp.float32,
    )                                              # (TM, TO) f32
    acc = acc + b_ref[...].astype(jnp.float32)     # broadcast (1, TO)
    o_ref[...] = acc.astype(o_ref.dtype)


def conv2d_same(x_nchw, weight_oihw, bias=None, stride=1, dilation=1,
                compute_dtype=None):
    """Matches Conv2dSame.forward: F.pad(total = d*(k-1)) then nn.Conv2d."""
    stride = _pair(stride)
    dilation = _pair(dilation)
    out_ch, in_ch, kh, kw = weight_oihw.shape
    n, c, h, w = x_nchw.shape
    assert c == in_ch

    # This module's padding: total = d*(k-1), left = total//2, right = rest
    # (independent of stride, exactly as in the PyTorch forward).
    pads = []
    for d, k in zip(dilation, (kh, kw)):
        total = d * (k - 1)
        left = total // 2
        pads.append((left, total - left))
    (ph_l, ph_r), (pw_l, pw_r) = pads
    sh, sw = stride
    dh, dw = dilation

    # TODO(synk): NCHW->NHWC transpose + zero pad remain XLA glue.
    x_nhwc = jnp.transpose(x_nchw, (0, 2, 3, 1))
    x_pad = jnp.pad(x_nhwc, ((0, 0), (ph_l, ph_r), (pw_l, pw_r), (0, 0)))

    hp = h + ph_l + ph_r
    wp = w + pw_l + pw_r
    out_h = (hp - dh * (kh - 1) - 1) // sh + 1
    out_w = (wp - dw * (kw - 1) - 1) // sw + 1

    # --- im2col in the wrapper (lane-dense contraction for small C). -------
    # Column order: ((i*kw + j)*C + c), matched below by the weight reshape.
    cols = []
    for i in range(kh):
        for j in range(kw):
            h0 = i * dh
            w0 = j * dw
            patch = x_pad[:, h0:h0 + (out_h - 1) * sh + 1:sh,
                             w0:w0 + (out_w - 1) * sw + 1:sw, :]  # (N,Ho,Wo,C)
            cols.append(patch)
    kdim = kh * kw * in_ch
    patches = jnp.concatenate(cols, axis=-1).reshape(n * out_h * out_w, kdim)

    # Flattened weights: OIHW -> (KH, KW, C, O) -> (KH*KW*C, O_pad).
    if out_ch <= 128:
        o_pad = 128                       # v5e MXU width; lane-dense everywhere
    else:
        o_pad = _round_up(out_ch, 256)    # v6e/v7x 256-wide MXU native tile
    w_2d = jnp.transpose(weight_oihw, (2, 3, 1, 0)).reshape(kdim, out_ch)
    w_2d = jnp.pad(w_2d, ((0, 0), (0, o_pad - out_ch)))

    if bias is None:
        b_2d = jnp.zeros((1, o_pad), dtype=jnp.float32)
    else:
        b_2d = jnp.pad(bias.astype(jnp.float32).reshape(1, out_ch),
                       ((0, 0), (0, o_pad - out_ch)))

    if compute_dtype is not None:
        patches = patches.astype(compute_dtype)
        w_2d = w_2d.astype(compute_dtype)

    # --- tiling ------------------------------------------------------------
    m = n * out_h * out_w
    tm = 256 if m >= 256 else _round_up(max(m, 8), 8)   # MXU/sublane friendly
    m_pad = _round_up(m, tm)
    if m_pad != m:
        patches = jnp.pad(patches, ((0, m_pad - m), (0, 0)))
    to = min(o_pad, 256)
    grid = (m_pad // tm, o_pad // to)

    # --- honest VMEM budget (lane/sublane padded blocks, double-buffered). --
    in_itemsize = jnp.dtype(patches.dtype).itemsize
    out_itemsize = jnp.dtype(x_nchw.dtype).itemsize
    lhs_blk = tm * _round_up(kdim, 128) * in_itemsize
    rhs_blk = _round_up(kdim, 8) * to * in_itemsize
    bias_blk = 8 * to * 4
    out_blk = tm * to * out_itemsize
    acc_tmp = tm * to * 4
    budget = 2 * (lhs_blk + rhs_blk + bias_blk + out_blk) + acc_tmp
    try:  # generation-aware ceiling: ~60% of physical VMEM, capped at 100 MiB.
        cap = min(100 * 1024 * 1024,
                  int(pltpu.get_tpu_info().vmem_capacity_bytes * 0.6))
    except Exception:
        cap = 32 * 1024 * 1024            # safe everywhere incl. v7x (64 MiB)
    vmem_limit = int(min(max(2 * budget, 16 * 1024 * 1024), cap))

    flops = 2 * m * kdim * out_ch
    bytes_accessed = (m_pad * kdim * in_itemsize
                      + kdim * o_pad * in_itemsize
                      + m_pad * o_pad * out_itemsize)

    # TODO(synk): on v7x consider pipeline_mode=pl.Buffered(3) on the LHS spec
    # to deepen prefetch once the per-step compute is very short.
    out_mat = pl.pallas_call(
        _matmul_bias_kernel,
        out_shape=jax.ShapeDtypeStruct((m_pad, o_pad), x_nchw.dtype),
        grid_spec=pltpu.PrefetchScalarGridSpec(
            num_scalar_prefetch=0,
            grid=grid,
            in_specs=[
                pl.BlockSpec((tm, kdim), lambda mi, oi: (mi, 0)),
                pl.BlockSpec((kdim, to), lambda mi, oi: (0, oi)),
                pl.BlockSpec((1, to), lambda mi, oi: (0, oi)),
            ],
            out_specs=pl.BlockSpec((tm, to), lambda mi, oi: (mi, oi)),
        ),
        compiler_params=pltpu.CompilerParams(
            dimension_semantics=("parallel", "parallel"),
            vmem_limit_bytes=vmem_limit,
        ),
        cost_estimate=pl.CostEstimate(
            flops=flops, transcendentals=0, bytes_accessed=bytes_accessed),
    )(patches, w_2d, b_2d)

    out_nhwc = out_mat[:m, :out_ch].reshape(n, out_h, out_w, out_ch)
    return jnp.transpose(out_nhwc, (0, 3, 1, 2))   # back to NCHW


if __name__ == "__main__":
    # Small shapes consistent with the module: Conv2dSame(in=4, out=8, k=3)
    N, C_IN, H, W = 2, 4, 16, 16
    C_OUT, K = 8, 3
    STRIDE, DILATION = 1, 1

    key = jax.random.PRNGKey(0)
    kx, kw_, kb = jax.random.split(key, 3)

    x = jax.random.normal(kx, (N, C_IN, H, W), dtype=jnp.float32)
    fan_in = C_IN * K * K
    bound = 1.0 / (fan_in ** 0.5)
    weight = jax.random.uniform(kw_, (C_OUT, C_IN, K, K),
                                minval=-bound, maxval=bound, dtype=jnp.float32)
    bias = jax.random.uniform(kb, (C_OUT,), minval=-bound, maxval=bound,
                              dtype=jnp.float32)

    out = conv2d_same(x, weight, bias, stride=STRIDE, dilation=DILATION)
    out = jax.block_until_ready(out)

    # Reference check against XLA conv with the module's padding arithmetic.
    d = _pair(DILATION)
    total_h = d[0] * (K - 1)
    total_w = d[1] * (K - 1)
    pad_h = (total_h // 2, total_h - total_h // 2)
    pad_w = (total_w // 2, total_w - total_w // 2)
    ref = jax.lax.conv_general_dilated(
        x, weight,
        window_strides=_pair(STRIDE),
        padding=[pad_h, pad_w],
        rhs_dilation=d,
        dimension_numbers=("NCHW", "OIHW", "NCHW"),
    ) + bias.reshape(1, -1, 1, 1)
    ref = jax.block_until_ready(ref)

    assert out.shape == ref.shape, (out.shape, ref.shape)
    assert jnp.allclose(out, ref, atol=1e-4, rtol=1e-4), "mismatch vs reference conv"

    print("KERNEL_OK")
</pallas_src>

<mosaic_0001>
module attributes {stable_mosaic.version = 11 : i64} {
  func.func @_matmul_bias_kernel(%arg0: i32, %arg1: i32, %arg2: memref<256x36xf32, #tpu.memory_space<vmem>>, %arg3: memref<36x128xf32, #tpu.memory_space<vmem>>, %arg4: memref<1x128xf32, #tpu.memory_space<vmem>>, %arg5: memref<256x128xf32, #tpu.memory_space<vmem>>) attributes {dimension_semantics = [#tpu.dimension_semantics<parallel>, #tpu.dimension_semantics<parallel>], iteration_bounds = array<i64: 2, 1>, scalar_prefetch = 0 : i64, scratch_operands = 0 : i64, tpu.core_type = #tpu.core_type<tc>, window_params = [{transform_indices = @transform_0, window_bounds = array<i64: 256, 36>}, {transform_indices = @transform_1, window_bounds = array<i64: 36, 128>}, {transform_indices = @transform_2, window_bounds = array<i64: 1, 128>}, {transform_indices = @transform_3, window_bounds = array<i64: 256, 128>}]} {
    %c0 = arith.constant 0 : index
    %c0_0 = arith.constant 0 : index
    %0 = vector.load %arg2[%c0, %c0_0] : memref<256x36xf32, #tpu.memory_space<vmem>>, vector<256x36xf32>
    %c0_1 = arith.constant 0 : index
    %c0_2 = arith.constant 0 : index
    %1 = vector.load %arg3[%c0_1, %c0_2] : memref<36x128xf32, #tpu.memory_space<vmem>>, vector<36x128xf32>
    %cst = arith.constant dense<0.000000e+00> : vector<256x128xf32>
    %2 = tpu.matmul %0, %1, %cst {dimension_numbers = #tpu.dot_dimension_numbers<[1], [0], [0], [1], [0, 0, 1, 1], [], []>} : vector<256x36xf32>, vector<36x128xf32>, vector<256x128xf32> -> vector<256x128xf32>
    %c0_3 = arith.constant 0 : index
    %c0_4 = arith.constant 0 : index
    %3 = vector.load %arg4[%c0_3, %c0_4] : memref<1x128xf32, #tpu.memory_space<vmem>>, vector<1x128xf32>
    %4 = vector.broadcast %3 : vector<1x128xf32> to vector<256x128xf32>
    %5 = arith.addf %2, %4 : vector<256x128xf32>
    %c0_5 = arith.constant 0 : index
    %c0_6 = arith.constant 0 : index
    %6 = vector.load %arg5[%c0_5, %c0_6] : memref<256x128xf32, #tpu.memory_space<vmem>>, vector<256x128xf32>
    tpu.vector_store %arg5[%c0_5, %c0_6], %5 {strides = array<i32>} : memref<256x128xf32, #tpu.memory_space<vmem>>, vector<256x128xf32>,
    return
  }
  func.func @transform_0(%arg0: i32, %arg1: i32) -> (i32, i32) {
    %c0_i32 = arith.constant 0 : i32
    %c0_i32_0 = arith.constant 0 : i32
    return %arg0, %c0_i32 : i32, i32
  }
  func.func @transform_1(%arg0: i32, %arg1: i32) -> (i32, i32) {
    %c0_i32 = arith.constant 0 : i32
    %c0_i32_0 = arith.constant 0 : i32
    return %c0_i32, %arg1 : i32, i32
  }
  func.func @transform_2(%arg0: i32, %arg1: i32) -> (i32, i32) {
    %c0_i32 = arith.constant 0 : i32
    %c0_i32_0 = arith.constant 0 : i32
    return %c0_i32, %arg1 : i32, i32
  }
  func.func @transform_3(%arg0: i32, %arg1: i32) -> (i32, i32) {
    %c0_i32 = arith.constant 0 : i32
    return %arg0, %arg1 : i32, i32
  }
}

</mosaic_0001>

<llo_original>
// kernel: tpu_custom_call.1
$region0: #{tpu_custom_call.1}
  #allocation0 [shape = 'u32[]', space=smem, size = 0x4, offset = 0x4, fixed_abs, tag = 'smem constant byte address 0x4 - core index']
  #allocation1 [shape = 'u32[144,128]{1,0:T(1,128)}', space=vmem, size = 0x12000, scoped, tag = 'internal scratch']
  %s0 = inlined_call_operand.vmem [shape: f32[512,36], index: 0, kind: input, shape index: {}]
  %s1 = inlined_call_operand.vmem [shape: f32[36,128], index: 1, kind: input, shape index: {}]
  %s2 = inlined_call_operand.vmem [shape: f32[1,128], index: 2, kind: input, shape index: {}]
  %s3 = inlined_call_operand.hbm [shape: f32[512,128], index: 3, kind: output, shape index: {}]
  %s4 = sld [smem:[#allocation0]]
  $region45: #{tpu_custom_call.1} parent=0
    _
  %s6 = ssub.s32 1, %s4
  %s7 = scalar_select 0, %s6, %s4
  $region1: #{tpu_custom_call.1} parent=0
    #allocation2 [shape = 'u8[262144]{0}', space=vmem, size = 0x40000, scoped, tag = 'output window, operand 0']
    #allocation3 [shape = 's32[2]{0}', space=sflag, size = 0x8, scoped, tag = 'scoped memory for tpu_custom_call.1']
    %8 = vsyncpa [#allocation3], 0
    %s9 = scalar_lea.sflag [#allocation3], 1
    %10 = vsyncpa %s9, 0
    loop: start=0, step=1, limit=4
    $region2: #{tpu_custom_call.1} parent=1 // loop_pre_header
      _
    $region3: #{tpu_custom_call.1} parent=1 // loop_header
      %s12 = sphi 0, %s16
      %p13 = scmp.ge.s32.totalorder %s12, 4
      %s19 = sphi 0, %s31
      %s20 = sphi 0, %s27
      %s21 = sphi 0, %s19
      %s22 = sphi 0, %s20
      %s23 = sphi 0, %s21
      %s24 = sphi 0, %s22
      %s34 = sphi 0, %s36
      %s37 = sphi 0, %s34
      %s38 = sphi 0, %s37
      %s54 = sphi 0, %s38
      %s60 = sphi 0, %s62
      %s63 = sphi 0, %s60
      %s64 = sphi 0, %s63
      %s80 = sphi 0, %s64
      %s86 = sphi 0, %s88
      %s89 = sphi 0, %s86
      %s90 = sphi 0, %s89
      %s106 = sphi 0, %s90
      %s114 = sphi 0, %s116
      %s117 = sphi 0, %s114
      %s118 = sphi 0, %s117
      %s134 = sphi 0, %s118
    $region4: #{tpu_custom_call.1} parent=1 // loop_header_branch
      %15 = sbr.rel (%p13) target = $region8
    $region5: #{tpu_custom_call.1} parent=1 // loop_body
      %s17 = ssub.s32 %s12, 1
      %s18 = ssub.s32 %s12, 2
      %s25 = sadd.s32 1, %s20
      %p26 = scmp.ge.s32.totalorder %s25, 1
      %s27 = scalar_select %p26, 0, %s25
      %s28 = sadd.s32 1, %s19
      %s29 = scalar_select %p26, %s28, %s19
      %p30 = scmp.ge.s32.totalorder %s29, 2
      %s31 = scalar_select %p30, 0, %s29
      %s32 = ssub.s32 %s19, %s31
      %p33 = scmp.eq.s32.totalorder %s32, 0
      %s35 = sadd.s32 %s34, 1
      %s36 = scalar_select %p33, %s34, %s35
      %p39 = pneg %p33
      %p40 = scmp.eq.s32.totalorder %s12, 1
      %p41 = por %p39, %p40
      %p42 = scmp.ne.s32.totalorder %s34, %s37
      %p43 = scmp.eq.s32.totalorder %s12, 0
      %p44 = por %p42, %p43
      %p45 = scmp.ne.s32.totalorder %s34, %s37
      %p46 = scmp.eq.s32.totalorder %s17, 1
      %p47 = por %p45, %p46
      %p48 = scmp.ne.s32.totalorder %s37, %s38
      %p49 = scmp.eq.s32.totalorder %s17, 0
      %p50 = por %p48, %p49
      %p51 = scmp.ne.s32.totalorder %s37, %s38
      %p52 = scmp.eq.s32.totalorder %s18, 1
      %p53 = por %p51, %p52
      %p55 = scmp.ne.s32.totalorder %s38, %s54
      %p56 = scmp.eq.s32.totalorder %s18, 0
      %p57 = por %p55, %p56
      %s58 = ssub.s32 %s20, %s27
      %p59 = scmp.eq.s32.totalorder %s58, 0
      %s61 = sadd.s32 %s60, 1
      %s62 = scalar_select %p59, %s60, %s61
      %p65 = pneg %p59
      %p66 = scmp.eq.s32.totalorder %s12, 1
      %p67 = por %p65, %p66
      %p68 = scmp.ne.s32.totalorder %s60, %s63
      %p69 = scmp.eq.s32.totalorder %s12, 0
      %p70 = por %p68, %p69
      %p71 = scmp.ne.s32.totalorder %s60, %s63
      %p72 = scmp.eq.s32.totalorder %s17, 1
      %p73 = por %p71, %p72
      %p74 = scmp.ne.s32.totalorder %s63, %s64
      %p75 = scmp.eq.s32.totalorder %s17, 0
      %p76 = por %p74, %p75
      %p77 = scmp.ne.s32.totalorder %s63, %s64
      %p78 = scmp.eq.s32.totalorder %s18, 1
      %p79 = por %p77, %p78
      %p81 = scmp.ne.s32.totalorder %s64, %s80
      %p82 = scmp.eq.s32.totalorder %s18, 0
      %p83 = por %p81, %p82
      %s84 = ssub.s32 %s20, %s27
      %p85 = scmp.eq.s32.totalorder %s84, 0
      %s87 = sadd.s32 %s86, 1
      %s88 = scalar_select %p85, %s86, %s87
      %p91 = pneg %p85
      %p92 = scmp.eq.s32.totalorder %s12, 1
      %p93 = por %p91, %p92
      %p94 = scmp.ne.s32.totalorder %s86, %s89
      %p95 = scmp.eq.s32.totalorder %s12, 0
      %p96 = por %p94, %p95
      %p97 = scmp.ne.s32.totalorder %s86, %s89
      %p98 = scmp.eq.s32.totalorder %s17, 1
      %p99 = por %p97, %p98
      %p100 = scmp.ne.s32.totalorder %s89, %s90
      %p101 = scmp.eq.s32.totalorder %s17, 0
      %p102 = por %p100, %p101
      %p103 = scmp.ne.s32.totalorder %s89, %s90
      %p104 = scmp.eq.s32.totalorder %s18, 1
      %p105 = por %p103, %p104
      %p107 = scmp.ne.s32.totalorder %s90, %s106
      %p108 = scmp.eq.s32.totalorder %s18, 0
      %p109 = por %p107, %p108
      %s110 = ssub.s32 %s19, %s31
      %s111 = ssub.s32 %s20, %s27
      %s112 = sor.u32 %s110, %s111
      %p113 = scmp.eq.s32.totalorder %s112, 0
      %s115 = sadd.s32 %s114, 1
      %s116 = scalar_select %p113, %s114, %s115
      %p119 = pneg %p113
      %p120 = scmp.eq.s32.totalorder %s12, 1
      %p121 = por %p119, %p120
      %p122 = scmp.ne.s32.totalorder %s114, %s117
      %p123 = scmp.eq.s32.totalorder %s12, 0
      %p124 = por %p122, %p123
      %p125 = scmp.ne.s32.totalorder %s114, %s117
      %p126 = scmp.eq.s32.totalorder %s17, 1
      %p127 = por %p125, %p126
      %p128 = scmp.ne.s32.totalorder %s117, %s118
      %p129 = scmp.eq.s32.totalorder %s17, 0
      %p130 = por %p128, %p129
      %p131 = scmp.ne.s32.totalorder %s117, %s118
      %p132 = scmp.eq.s32.totalorder %s18, 1
      %p133 = por %p131, %p132
      %p135 = scmp.ne.s32.totalorder %s118, %s134
      %p136 = scmp.eq.s32.totalorder %s18, 0
      %p137 = por %p135, %p136
      %p138 = scmp.le.s32.totalorder 1, %s12
      %p139 = scmp.lt.s32.totalorder %s12, 3
      %p140 = pnand %p138, %p139
      %p141 = pneg %p140
      // Predicated region
      $region9: #{tpu_custom_call.1} parent=5 // pred_check
        _
      $region10: #{tpu_custom_call.1} parent=5 // pred_check_branch
        %143 = sbr.rel (%p140) target = $region12
      $region11: #{tpu_custom_call.1} parent=5 // pred_region
        %s144 = ssub.s32 %s12, 1
        // Predicated region
        $region13: #{tpu_custom_call.1} parent=11 // pred_check
          %p145 = pneg %p76
        $region14: #{tpu_custom_call.1} parent=11 // pred_check_branch
          %147 = sbr.rel (%p145) target = $region16
        $region15: #{tpu_custom_call.1} parent=11 // pred_region
          %p148 = scmp.lt.s32.totalorder %s22, 0
          %s149 = scalar_select %p148, %s22, 0
          %s150 = smul.addr %s149, 8
          %s151 = scalar_lea.vmem %s1, %s150
        $region16: #{tpu_custom_call.1} parent=11 // pred_fallthru
          _
        // Predicated region
        $region17: #{tpu_custom_call.1} parent=11 // pred_check
          %p152 = pneg %p102
        $region18: #{tpu_custom_call.1} parent=11 // pred_check_branch
          %154 = sbr.rel (%p152) target = $region20
        $region19: #{tpu_custom_call.1} parent=11 // pred_region
          %p155 = scmp.lt.s32.totalorder %s22, 0
          %s156 = scalar_select %p155, %s22, 0
          %s157 = scalar_lea.vmem %s2, %s156
        $region20: #{tpu_custom_call.1} parent=11 // pred_fallthru
          _
      $region12: #{tpu_custom_call.1} parent=5 // pred_fallthru
        _
      %p158 = scmp.lt.s32.totalorder %s12, 2
      // Predicated region
      $region21: #{tpu_custom_call.1} parent=5 // pred_check
        %p159 = pneg %p158
      $region22: #{tpu_custom_call.1} parent=5 // pred_check_branch
        %161 = sbr.rel (%p159) target = $region24
      $region23: #{tpu_custom_call.1} parent=5 // pred_region
        // Predicated region
        $region25: #{tpu_custom_call.1} parent=23 // pred_check
          %p162 = pneg %p44
        $region26: #{tpu_custom_call.1} parent=23 // pred_check_branch
          %164 = sbr.rel (%p162) target = $region28
        $region27: #{tpu_custom_call.1} parent=23 // pred_region
          %s165 = smul.u32 32, %s19
          %p166 = scmp.lt.s32.totalorder %s165, 63
          %s167 = scalar_select %p166, %s165, 63
          %s168 = smul.addr %s167, 8
          %s169 = scalar_lea.vmem %s0, %s168
          %s170 = smul.u32 32, %s19
        $region28: #{tpu_custom_call.1} parent=23 // pred_fallthru
          _
      $region24: #{tpu_custom_call.1} parent=5 // pred_fallthru
        _
      %p171 = scmp.le.s32.totalorder 1, %s12
      %p172 = scmp.lt.s32.totalorder %s12, 3
      %p173 = pnand %p171, %p172
      %p174 = pneg %p173
      // Predicated region
      $region29: #{tpu_custom_call.1} parent=5 // pred_check
        _
      $region30: #{tpu_custom_call.1} parent=5 // pred_check_branch
        %176 = sbr.rel (%p173) target = $region32
      $region31: #{tpu_custom_call.1} parent=5 // pred_region
        %s177 = ssub.s32 %s12, 1
        %s178 = smul.u32 32, %s21
        %p179 = scmp.lt.s32.totalorder %s178, 63
        %s180 = scalar_select %p179, %s178, 63
        %s181 = smul.addr %s180, 8
        %s182 = scalar_lea.vmem %s0, %s181
        %p183 = pneg %p50
        %p184 = pneg %p47
        %p185 = scmp.lt.s32.totalorder %s22, 0
        %s186 = scalar_select %p185, %s22, 0
        %s187 = smul.addr %s186, 8
        %s188 = scalar_lea.vmem %s1, %s187
        %p189 = pneg %p76
        %p190 = pneg %p73
        %p191 = scmp.lt.s32.totalorder %s22, 0
        %s192 = scalar_select %p191, %s22, 0
        %s193 = scalar_lea.vmem %s2, %s192
        %p194 = pneg %p102
        %p195 = pneg %p99
        %p196 = pneg %p130
        %p197 = pneg %p127
        %s198 = sand.u32 %s117, 1
        %s199 = scalar_lea.sflag [#allocation3], %s198
        %s200 = sand.u32 %s117, 1
        %s201 = smul.addr %s200, 256
        %s202 = scalar_lea.vmem [#allocation2], %s201
        %s203 = smul.u32 32, %s21
        %p204 = scmp.lt.s32.totalorder %s203, 63
        %s205 = scalar_select %p204, %s203, 63
        %s206 = smul.addr %s205, 8
        %s207 = scalar_lea.vmem %s0, %s206
        %s208 = smul.u32 32, %s21
        %p209 = scmp.lt.s32.totalorder %s22, 0
        %s210 = scalar_select %p209, %s22, 0
        %s211 = smul.addr %s210, 8
        %s212 = scalar_lea.vmem %s1, %s211
        %p213 = scmp.lt.s32.totalorder %s22, 0
        %s214 = scalar_select %p213, %s22, 0
        %s215 = scalar_lea.vmem %s2, %s214
        %s216 = smul.u32 32, %s21
        %v217 = vld [vmem:[%s207] sm:$0xff]
        %v218 = vld [vmem:[%s207 + $0x8] sm:$0xff]
        %v219 = vld [vmem:[%s207 + $0x10] sm:$0xff]
        %v220 = vld [vmem:[%s207 + $0x18] sm:$0xff]
        %v221 = vld [vmem:[%s207 + $0x20] sm:$0xff]
        %v222 = vld [vmem:[%s207 + $0x28] sm:$0xff]
        %v223 = vld [vmem:[%s207 + $0x30] sm:$0xff]
        %v224 = vld [vmem:[%s207 + $0x38] sm:$0xff]
        %v225 = vld [vmem:[%s207 + $0x40] sm:$0xff]
        %v226 = vld [vmem:[%s207 + $0x48] sm:$0xff]
        %v227 = vld [vmem:[%s207 + $0x50] sm:$0xff]
        %v228 = vld [vmem:[%s207 + $0x58] sm:$0xff]
        %v229 = vld [vmem:[%s207 + $0x60] sm:$0xff]
        %v230 = vld [vmem:[%s207 + $0x68] sm:$0xff]
        %v231 = vld [vmem:[%s207 + $0x70] sm:$0xff]
        %v232 = vld [vmem:[%s207 + $0x78] sm:$0xff]
        %v233 = vld [vmem:[%s207 + $0x80] sm:$0xff]
        %v234 = vld [vmem:[%s207 + $0x88] sm:$0xff]
        %v235 = vld [vmem:[%s207 + $0x90] sm:$0xff]
        %v236 = vld [vmem:[%s207 + $0x98] sm:$0xff]
        %v237 = vld [vmem:[%s207 + $0xa0] sm:$0xff]
        %v238 = vld [vmem:[%s207 + $0xa8] sm:$0xff]
        %v239 = vld [vmem:[%s207 + $0xb0] sm:$0xff]
        %v240 = vld [vmem:[%s207 + $0xb8] sm:$0xff]
        %v241 = vld [vmem:[%s207 + $0xc0] sm:$0xff]
        %v242 = vld [vmem:[%s207 + $0xc8] sm:$0xff]
        %v243 = vld [vmem:[%s207 + $0xd0] sm:$0xff]
        %v244 = vld [vmem:[%s207 + $0xd8] sm:$0xff]
        %v245 = vld [vmem:[%s207 + $0xe0] sm:$0xff]
        %v246 = vld [vmem:[%s207 + $0xe8] sm:$0xff]
        %v247 = vld [vmem:[%s207 + $0xf0] sm:$0xff]
        %v248 = vld [vmem:[%s207 + $0xf8] sm:$0xff]
        %v249 = vld [vmem:[%s212] sm:$0xff]
        %v250 = vld [vmem:[%s212 + $0x8] sm:$0xff]
        %v251 = vld [vmem:[%s212 + $0x10] sm:$0xff]
        %v252 = vld [vmem:[%s212 + $0x18] sm:$0xff]
        %v253 = vld [vmem:[%s212 + $0x20] sm:$0xf]
        %v254 = vld [vmem:[%s215] sm:$0x1]
        %v256 = vlaneseq
        %v257 = vshrl.u32 %v256, 7
        %v258 = vsub.s32 0, %v257
        %v259 = vrot.slane %v254, %v258
        %vm261 = vcmask 293888
        %v263 = vsel %vm261, %v217, 0
        %v266 = vsel %vm261, %v218, 0
        %v269 = vsel %vm261, %v219, 0
        %v272 = vsel %vm261, %v220, 0
        %v275 = vsel %vm261, %v221, 0
        %v278 = vsel %vm261, %v222, 0
        %v281 = vsel %vm261, %v223, 0
        %v284 = vsel %vm261, %v224, 0
        %v287 = vsel %vm261, %v225, 0
        %v290 = vsel %vm261, %v226, 0
        %v293 = vsel %vm261, %v227, 0
        %v296 = vsel %vm261, %v228, 0
        %v299 = vsel %vm261, %v229, 0
        %v302 = vsel %vm261, %v230, 0
        %v305 = vsel %vm261, %v231, 0
        %v308 = vsel %vm261, %v232, 0
        %v311 = vsel %vm261, %v233, 0
        %v314 = vsel %vm261, %v234, 0
        %v317 = vsel %vm261, %v235, 0
        %v320 = vsel %vm261, %v236, 0
        %v323 = vsel %vm261, %v237, 0
        %v326 = vsel %vm261, %v238, 0
        %v329 = vsel %vm261, %v239, 0
        %v332 = vsel %vm261, %v240, 0
        %v335 = vsel %vm261, %v241, 0
        %v338 = vsel %vm261, %v242, 0
        %v341 = vsel %vm261, %v243, 0
        %v344 = vsel %vm261, %v244, 0
        %v347 = vsel %vm261, %v245, 0
        %v350 = vsel %vm261, %v246, 0
        %v353 = vsel %vm261, %v247, 0
        %v356 = vsel %vm261, %v248, 0
        %vm358 = vcmask 1043456
        %v360 = vsel %vm358, %v253, 0
        %362 = vmatprep.subr.mxu0 0.0
        %363 = vmatpush1.msra.mxu0 %v249
        %364 = vmatprep.subr.mxu0 0.0
        %365 = vmatpush1.msra.mxu0 %v250
        %366 = vmatprep.subr.mxu0 0.0
        %367 = vmatpush1.msra.mxu0 %v251
        %368 = vmatprep.subr.mxu0 0.0
        %369 = vmatpush1.msra.mxu0 %v252
        %370 = vmatprep.subr.mxu0 0.0
        %371 = vmatpush1.msra.mxu0 %v360
        %372 = vmatprep.subr.mxu0 0.0
        %373 = vmatpush1.msra.mxu0 0.0
        %374 = vmatprep.subr.mxu0 0.0
        %375 = vmatpush1.msra.mxu0 0.0
        %376 = vmatprep.subr.mxu0 0.0
        %377 = vmatpush1.msra.mxu0 0.0
        %378 = vmatprep.subr.mxu0 0.0
        %379 = vmatpush1.msra.mxu0 0.0
        %380 = vmatprep.subr.mxu0 0.0
        %381 = vmatpush1.msra.mxu0 0.0
        %382 = vmatprep.subr.mxu0 0.0
        %383 = vmatpush1.msra.mxu0 0.0
        %384 = vmatprep.subr.mxu0 0.0
        %385 = vmatpush1.msra.mxu0 0.0
        %386 = vmatprep.subr.mxu0 0.0
        %387 = vmatpush1.msra.mxu0 0.0
        %388 = vmatprep.subr.mxu0 0.0
        %389 = vmatpush1.msra.mxu0 0.0
        %390 = vmatprep.subr.mxu0 0.0
        %391 = vmatpush1.msra.mxu0 0.0
        %392 = vmatprep.subr.mxu0 0.0
        %393 = vmatpush1.msra.mxu0 0.0
        %394 = vmatprep.subr.mxu0 0.0
        %395 = vmatpush1.msra.mxu0 0.0
        %396 = vmatprep.subr.mxu0 0.0
        %397 = vmatpush1.msra.mxu0 0.0
        %398 = vmatprep.subr.mxu0 0.0
        %399 = vmatpush1.msra.mxu0 0.0
        %400 = vmatprep.subr.mxu0 0.0
        %401 = vmatpush1.msra.mxu0 0.0
        %402 = vmatprep.subr.mxu0 0.0
        %403 = vmatpush1.msra.mxu0 0.0
        %404 = vmatprep.subr.mxu0 0.0
        %405 = vmatpush1.msra.mxu0 0.0
        %406 = vmatprep.subr.mxu0 0.0
        %407 = vmatpush1.msra.mxu0 0.0
        %408 = vmatprep.subr.mxu0 0.0
        %409 = vmatpush1.msra.mxu0 0.0
        %410 = vmatprep.subr.mxu0 0.0
        %411 = vmatpush1.msra.mxu0 0.0
        %412 = vmatprep.subr.mxu0 0.0
        %413 = vmatpush1.msra.mxu0 0.0
        %414 = vmatprep.subr.mxu0 0.0
        %415 = vmatpush1.msra.mxu0 0.0
        %416 = vmatprep.subr.mxu0 0.0
        %417 = vmatpush1.msra.mxu0 0.0
        %418 = vmatprep.subr.mxu0 0.0
        %419 = vmatpush1.msra.mxu0 0.0
        %420 = vmatprep.subr.mxu0 0.0
        %421 = vmatpush1.msra.mxu0 0.0
        %422 = vmatprep.subr.mxu0 0.0
        %423 = vmatpush1.msra.mxu0 0.0
        %424 = vmatprep.subr.mxu0 0.0
        %425 = vmatpush1.msra.mxu0 0.0
        %426 = vmatprep.mubr.f32.mxu0 0.0
        %427 = vmatmul.mubr.f32.gmra.mrb[0].mxu0 %v263
        %v428 = vpop.f32.mrb[0].mxu0
        %v429 = vadd.f32 %v259, %v428
        %v430 = vpop.f32.mrb[0].mxu0
        %431 = vmatprep.mubr.f32.mxu0 0.0
        %432 = vmatmul.mubr.f32.gmra.mrb[0].mxu0 %v266
        %v433 = vpop.f32.mrb[0].mxu0
        %v434 = vadd.f32 %v259, %v433
        %v435 = vpop.f32.mrb[0].mxu0
        %436 = vmatprep.mubr.f32.mxu0 0.0
        %437 = vmatmul.mubr.f32.gmra.mrb[0].mxu0 %v269
        %v438 = vpop.f32.mrb[0].mxu0
        %v439 = vadd.f32 %v259, %v438
        %v440 = vpop.f32.mrb[0].mxu0
        %441 = vmatprep.mubr.f32.mxu0 0.0
        %442 = vmatmul.mubr.f32.gmra.mrb[0].mxu0 %v272
        %v443 = vpop.f32.mrb[0].mxu0
        %v444 = vadd.f32 %v259, %v443
        %v445 = vpop.f32.mrb[0].mxu0
        %446 = vmatprep.mubr.f32.mxu0 0.0
        %447 = vmatmul.mubr.f32.gmra.mrb[0].mxu0 %v275
        %v448 = vpop.f32.mrb[0].mxu0
        %v449 = vadd.f32 %v259, %v448
        %v450 = vpop.f32.mrb[0].mxu0
        %451 = vmatprep.mubr.f32.mxu0 0.0
        %452 = vmatmul.mubr.f32.gmra.mrb[0].mxu0 %v278
        %v453 = vpop.f32.mrb[0].mxu0
        %v454 = vadd.f32 %v259, %v453
        %v455 = vpop.f32.mrb[0].mxu0
        %456 = vmatprep.mubr.f32.mxu0 0.0
        %457 = vmatmul.mubr.f32.gmra.mrb[0].mxu0 %v281
        %v458 = vpop.f32.mrb[0].mxu0
        %v459 = vadd.f32 %v259, %v458
        %v460 = vpop.f32.mrb[0].mxu0
        %461 = vmatprep.mubr.f32.mxu0 0.0
        %462 = vmatmul.mubr.f32.gmra.mrb[0].mxu0 %v284
        %v463 = vpop.f32.mrb[0].mxu0
        %v464 = vadd.f32 %v259, %v463
        %v465 = vpop.f32.mrb[0].mxu0
        %466 = vmatprep.mubr.f32.mxu0 0.0
        %467 = vmatmul.mubr.f32.gmra.mrb[0].mxu0 %v287
        %v468 = vpop.f32.mrb[0].mxu0
        %v469 = vadd.f32 %v259, %v468
        %v470 = vpop.f32.mrb[0].mxu0
        %471 = vmatprep.mubr.f32.mxu0 0.0
        %472 = vmatmul.mubr.f32.gmra.mrb[0].mxu0 %v290
        %v473 = vpop.f32.mrb[0].mxu0
        %v474 = vadd.f32 %v259, %v473
        %v475 = vpop.f32.mrb[0].mxu0
        %476 = vmatprep.mubr.f32.mxu0 0.0
        %477 = vmatmul.mubr.f32.gmra.mrb[0].mxu0 %v293
        %v478 = vpop.f32.mrb[0].mxu0
        %v479 = vadd.f32 %v259, %v478
        %v480 = vpop.f32.mrb[0].mxu0
        %481 = vmatprep.mubr.f32.mxu0 0.0
        %482 = vmatmul.mubr.f32.gmra.mrb[0].mxu0 %v296
        %v483 = vpop.f32.mrb[0].mxu0
        %v484 = vadd.f32 %v259, %v483
        %v485 = vpop.f32.mrb[0].mxu0
        %486 = vmatprep.mubr.f32.mxu0 0.0
        %487 = vmatmul.mubr.f32.gmra.mrb[0].mxu0 %v299
        %v488 = vpop.f32.mrb[0].mxu0
        %v489 = vadd.f32 %v259, %v488
        %v490 = vpop.f32.mrb[0].mxu0
        %491 = vmatprep.mubr.f32.mxu0 0.0
        %492 = vmatmul.mubr.f32.gmra.mrb[0].mxu0 %v302
        %v493 = vpop.f32.mrb[0].mxu0
        %v494 = vadd.f32 %v259, %v493
        %v495 = vpop.f32.mrb[0].mxu0
        %496 = vmatprep.mubr.f32.mxu0 0.0
        %497 = vmatmul.mubr.f32.gmra.mrb[0].mxu0 %v305
        %v498 = vpop.f32.mrb[0].mxu0
        %v499 = vadd.f32 %v259, %v498
        %v500 = vpop.f32.mrb[0].mxu0
        %501 = vmatprep.mubr.f32.mxu0 0.0
        %502 = vmatmul.mubr.f32.gmra.mrb[0].mxu0 %v308
        %v503 = vpop.f32.mrb[0].mxu0
        %v504 = vadd.f32 %v259, %v503
        %v505 = vpop.f32.mrb[0].mxu0
        %506 = vmatprep.mubr.f32.mxu0 0.0
        %507 = vmatmul.mubr.f32.gmra.mrb[0].mxu0 %v311
        %v508 = vpop.f32.mrb[0].mxu0
        %v509 = vadd.f32 %v259, %v508
        %v510 = vpop.f32.mrb[0].mxu0
        %511 = vmatprep.mubr.f32.mxu0 0.0
        %512 = vmatmul.mubr.f32.gmra.mrb[0].mxu0 %v314
        %v513 = vpop.f32.mrb[0].mxu0
        %v514 = vadd.f32 %v259, %v513
        %v515 = vpop.f32.mrb[0].mxu0
        %516 = vmatprep.mubr.f32.mxu0 0.0
        %517 = vmatmul.mubr.f32.gmra.mrb[0].mxu0 %v317
        %v518 = vpop.f32.mrb[0].mxu0
        %v519 = vadd.f32 %v259, %v518
        %v520 = vpop.f32.mrb[0].mxu0
        %521 = vmatprep.mubr.f32.mxu0 0.0
        %522 = vmatmul.mubr.f32.gmra.mrb[0].mxu0 %v320
        %v523 = vpop.f32.mrb[0].mxu0
        %v524 = vadd.f32 %v259, %v523
        %v525 = vpop.f32.mrb[0].mxu0
        %526 = vmatprep.mubr.f32.mxu0 0.0
        %527 = vmatmul.mubr.f32.gmra.mrb[0].mxu0 %v323
        %v528 = vpop.f32.mrb[0].mxu0
        %v529 = vadd.f32 %v259, %v528
        %v530 = vpop.f32.mrb[0].mxu0
        %531 = vmatprep.mubr.f32.mxu0 0.0
        %532 = vmatmul.mubr.f32.gmra.mrb[0].mxu0 %v326
        %v533 = vpop.f32.mrb[0].mxu0
        %v534 = vadd.f32 %v259, %v533
        %v535 = vpop.f32.mrb[0].mxu0
        %536 = vmatprep.mubr.f32.mxu0 0.0
        %537 = vmatmul.mubr.f32.gmra.mrb[0].mxu0 %v329
        %v538 = vpop.f32.mrb[0].mxu0
        %v539 = vadd.f32 %v259, %v538
        %v540 = vpop.f32.mrb[0].mxu0
        %541 = vmatprep.mubr.f32.mxu0 0.0
        %542 = vmatmul.mubr.f32.gmra.mrb[0].mxu0 %v332
        %v543 = vpop.f32.mrb[0].mxu0
        %v544 = vadd.f32 %v259, %v543
        %v545 = vpop.f32.mrb[0].mxu0
        %546 = vmatprep.mubr.f32.mxu0 0.0
        %547 = vmatmul.mubr.f32.gmra.mrb[0].mxu0 %v335
        %v548 = vpop.f32.mrb[0].mxu0
        %v549 = vadd.f32 %v259, %v548
        %v550 = vpop.f32.mrb[0].mxu0
        %551 = vmatprep.mubr.f32.mxu0 0.0
        %552 = vmatmul.mubr.f32.gmra.mrb[0].mxu0 %v338
        %v553 = vpop.f32.mrb[0].mxu0
        %v554 = vadd.f32 %v259, %v553
        %v555 = vpop.f32.mrb[0].mxu0
        %556 = vmatprep.mubr.f32.mxu0 0.0
        %557 = vmatmul.mubr.f32.gmra.mrb[0].mxu0 %v341
        %v558 = vpop.f32.mrb[0].mxu0
        %v559 = vadd.f32 %v259, %v558
        %v560 = vpop.f32.mrb[0].mxu0
        %561 = vmatprep.mubr.f32.mxu0 0.0
        %562 = vmatmul.mubr.f32.gmra.mrb[0].mxu0 %v344
        %v563 = vpop.f32.mrb[0].mxu0
        %v564 = vadd.f32 %v259, %v563
        %v565 = vpop.f32.mrb[0].mxu0
        %566 = vmatprep.mubr.f32.mxu0 0.0
        %567 = vmatmul.mubr.f32.gmra.mrb[0].mxu0 %v347
        %v568 = vpop.f32.mrb[0].mxu0
        %v569 = vadd.f32 %v259, %v568
        %v570 = vpop.f32.mrb[0].mxu0
        %571 = vmatprep.mubr.f32.mxu0 0.0
        %572 = vmatmul.mubr.f32.gmra.mrb[0].mxu0 %v350
        %v573 = vpop.f32.mrb[0].mxu0
        %v574 = vadd.f32 %v259, %v573
        %v575 = vpop.f32.mrb[0].mxu0
        %576 = vmatprep.mubr.f32.mxu0 0.0
        %577 = vmatmul.mubr.f32.gmra.mrb[0].mxu0 %v353
        %v578 = vpop.f32.mrb[0].mxu0
        %v579 = vadd.f32 %v259, %v578
        %v580 = vpop.f32.mrb[0].mxu0
        %581 = vmatprep.mubr.f32.mxu0 0.0
        %582 = vmatmul.mubr.f32.gmra.mrb[0].mxu0 %v356
        %v583 = vpop.f32.mrb[0].mxu0
        %v584 = vadd.f32 %v259, %v583
        %v585 = vpop.f32.mrb[0].mxu0
        %586 = vdwg.mxu0
        %587 = vst [vmem:[%s202] sm:$0xff] %v429
        %588 = vst [vmem:[%s202 + $0x8] sm:$0xff] %v434
        %589 = vst [vmem:[%s202 + $0x10] sm:$0xff] %v439
        %590 = vst [vmem:[%s202 + $0x18] sm:$0xff] %v444
        %591 = vst [vmem:[%s202 + $0x20] sm:$0xff] %v449
        %592 = vst [vmem:[%s202 + $0x28] sm:$0xff] %v454
        %593 = vst [vmem:[%s202 + $0x30] sm:$0xff] %v459
        %594 = vst [vmem:[%s202 + $0x38] sm:$0xff] %v464
        %595 = vst [vmem:[%s202 + $0x40] sm:$0xff] %v469
        %596 = vst [vmem:[%s202 + $0x48] sm:$0xff] %v474
        %597 = vst [vmem:[%s202 + $0x50] sm:$0xff] %v479
        %598 = vst [vmem:[%s202 + $0x58] sm:$0xff] %v484
        %599 = vst [vmem:[%s202 + $0x60] sm:$0xff] %v489
        %600 = vst [vmem:[%s202 + $0x68] sm:$0xff] %v494
        %601 = vst [vmem:[%s202 + $0x70] sm:$0xff] %v499
        %602 = vst [vmem:[%s202 + $0x78] sm:$0xff] %v504
        %603 = vst [vmem:[%s202 + $0x80] sm:$0xff] %v509
        %604 = vst [vmem:[%s202 + $0x88] sm:$0xff] %v514
        %605 = vst [vmem:[%s202 + $0x90] sm:$0xff] %v519
        %606 = vst [vmem:[%s202 + $0x98] sm:$0xff] %v524
        %607 = vst [vmem:[%s202 + $0xa0] sm:$0xff] %v529
        %608 = vst [vmem:[%s202 + $0xa8] sm:$0xff] %v534
        %609 = vst [vmem:[%s202 + $0xb0] sm:$0xff] %v539
        %610 = vst [vmem:[%s202 + $0xb8] sm:$0xff] %v544
        %611 = vst [vmem:[%s202 + $0xc0] sm:$0xff] %v549
        %612 = vst [vmem:[%s202 + $0xc8] sm:$0xff] %v554
        %613 = vst [vmem:[%s202 + $0xd0] sm:$0xff] %v559
        %614 = vst [vmem:[%s202 + $0xd8] sm:$0xff] %v564
        %615 = vst [vmem:[%s202 + $0xe0] sm:$0xff] %v569
        %616 = vst [vmem:[%s202 + $0xe8] sm:$0xff] %v574
        %617 = vst [vmem:[%s202 + $0xf0] sm:$0xff] %v579
        %618 = vst [vmem:[%s202 + $0xf8] sm:$0xff] %v584
        %s619 = sand.u32 %s117, 1
        %s620 = scalar_lea.sflag [#allocation3], %s619
        %s621 = sand.u32 %s117, 1
        %s622 = smul.addr %s621, 256
        %s623 = scalar_lea.vmem [#allocation2], %s622
        // Predicated region
        $region33: #{tpu_custom_call.1} parent=31 // pred_check
          %p624 = pneg %p127
        $region34: #{tpu_custom_call.1} parent=31 // pred_check_branch
          %626 = sbr.rel (%p624) target = $region36
        $region35: #{tpu_custom_call.1} parent=31 // pred_region
          %s627 = smul.u32 32, %s21
          %s629 = ssub.s32 4096, 4096
          %630 = vsyncadd %s620, %s629
          %s631 = sadd.s32 %s22, %s627
          %s632 = smul.addr %s631, 128
          %s633 = scalar_lea.hbm %s3, %s632
          %s634 = sshll.u32 %s623, 4
          %s635 = int_to_ptr.vmem [resolvable:$true] %s634
          %640 = dma.vmem_to_hbm [thread:$0]  %s635, 4096, %s633, %s620, 128, 128, 8
        $region36: #{tpu_custom_call.1} parent=31 // pred_fallthru
          _
      $region32: #{tpu_custom_call.1} parent=5 // pred_fallthru
        _
      %p641 = scmp.le.s32.totalorder 2, %s12
      // Predicated region
      $region37: #{tpu_custom_call.1} parent=5 // pred_check
        %p642 = pneg %p641
      $region38: #{tpu_custom_call.1} parent=5 // pred_check_branch
        %644 = sbr.rel (%p642) target = $region40
      $region39: #{tpu_custom_call.1} parent=5 // pred_region
        %s645 = ssub.s32 %s12, 2
        // Predicated region
        $region41: #{tpu_custom_call.1} parent=39 // pred_check
          %p646 = pneg %p133
        $region42: #{tpu_custom_call.1} parent=39 // pred_check_branch
          %648 = sbr.rel (%p646) target = $region44
        $region43: #{tpu_custom_call.1} parent=39 // pred_region
          %s649 = sand.u32 %s118, 1
          %s650 = scalar_lea.sflag [#allocation3], %s649
          %s651 = sand.u32 %s118, 1
          %s652 = smul.addr %s651, 256
          %s653 = scalar_lea.vmem [#allocation2], %s652
          %654 = dma.done %s650, 4096
        $region44: #{tpu_custom_call.1} parent=39 // pred_fallthru
          _
      $region40: #{tpu_custom_call.1} parent=5 // pred_fallthru
        _
    $region6: #{tpu_custom_call.1} parent=1 // loop_footer
      %s16 = sadd.s32 1, %s12
    $region7: #{tpu_custom_call.1} parent=1 // loop_footer_branch
      %11 = sbr.rel target = $region3
    $region8: #{tpu_custom_call.1} parent=1 // loop_exit
      _
    %655 = vsyncpa [#allocation3], 1
    %s656 = scalar_lea.sflag [#allocation3], 1
    %657 = vsyncpa %s656, 1

</llo_original>
